<compile_context>
chip_gen: v7x
topology: tpu7x:2x2x1
jax: 0.10.0
libtpu: 0.0.40
codegen_flags: <defaults>
</compile_context>

<pallas_src>
import jax
import jax.numpy as jnp
from jax.experimental import pallas as pl
from jax.experimental.pallas import tpu as pltpu


def _dma_copy_kernel(x_hbm, o_hbm, sem):
    # forward(x) == x  ->  one whole-buffer HBM->HBM DMA, no VMEM staging.
    cp = pltpu.make_async_copy(x_hbm, o_hbm, sem)
    cp.start()
    cp.wait()


def mapping_network_forward(x, *, materialize=True):
    """Identity mapping-network forward.

    materialize=False : return x unchanged (the true zero-cost implementation).
    materialize=True  : produce a distinct output buffer via a single
                        HBM->HBM DMA Pallas kernel (no VMEM round trip).
    """
    if not materialize:
        return x

    if x.size == 0:
        # Zero bytes to move; launching a kernel would be pure overhead and the
        # old reshape(1, max(n, 1)) path raised on this case.
        return x

    orig_shape = x.shape
    # Present at least a 2-D contiguous view to the kernel; reshape of a
    # contiguous row-major array is free.  Any shape/alignment is fine for the
    # DMA (no (8,128) divisibility requirement on ANY-space refs).
    if x.ndim == 0:
        x2 = x.reshape(1, 1)
    elif x.ndim == 1:
        x2 = x.reshape(1, orig_shape[0])
    else:
        x2 = x

    out = pl.pallas_call(
        _dma_copy_kernel,
        out_shape=jax.ShapeDtypeStruct(x2.shape, x2.dtype),
        in_specs=[pl.BlockSpec(memory_space=pl.ANY)],
        out_specs=pl.BlockSpec(memory_space=pl.ANY),
        scratch_shapes=[pltpu.SemaphoreType.DMA],
    )(x2)
    return out.reshape(orig_shape)


if __name__ == "__main__":
    key = jax.random.PRNGKey(0)

    # Mapping-network style latent codes: [batch, latent_dim].
    x = jax.random.normal(key, (2, 512), dtype=jnp.float32)
    y = mapping_network_forward(x)
    jax.block_until_ready(y)
    assert y.shape == x.shape and y.dtype == x.dtype
    assert bool(jnp.array_equal(y, x)), "identity kernel mismatch (2, 512)"

    # Non-128-aligned latent dim (previously the fragile VMEM fallback path).
    x_small = jax.random.normal(jax.random.PRNGKey(0), (2, 32), dtype=jnp.float32)
    y_small = mapping_network_forward(x_small)
    jax.block_until_ready(y_small)
    assert y_small.shape == x_small.shape and y_small.dtype == x_small.dtype
    assert bool(jnp.array_equal(y_small, x_small)), "identity kernel mismatch (2, 32)"

    # Zero-size input: elided (no kernel), returns x unchanged.
    x_empty = jnp.zeros((0, 512), dtype=jnp.float32)
    y_empty = mapping_network_forward(x_empty)
    assert y_empty.shape == x_empty.shape and y_empty.dtype == x_empty.dtype

    # Zero-cost path (op elided entirely), as recommended by the perf review.
    y_elided = mapping_network_forward(x, materialize=False)
    assert y_elided is x

    print("KERNEL_OK")
</pallas_src>

<mosaic_0001>
module attributes {stable_mosaic.version = 11 : i64} {
  func.func @_dma_copy_kernel(%arg0: memref<2x512xf32, #tpu.memory_space<any>>, %arg1: memref<2x512xf32, #tpu.memory_space<any>>, %arg2: memref<!tpu.dma_semaphore, #tpu.memory_space<semaphore_mem>>) attributes {dimension_semantics = [], scalar_prefetch = 0 : i64, scratch_operands = 1 : i64, tpu.core_type = #tpu.core_type<tc>} {
    tpu.enqueue_dma source(%arg0 : memref<2x512xf32, #tpu.memory_space<any>>) target(%arg1 : memref<2x512xf32, #tpu.memory_space<any>>) target_semaphore(%arg2 : memref<!tpu.dma_semaphore, #tpu.memory_space<semaphore_mem>>)
    tpu.wait_dma2 semaphore(%arg2 : memref<!tpu.dma_semaphore, #tpu.memory_space<semaphore_mem>>) src(%arg0 : memref<2x512xf32, #tpu.memory_space<any>>) dst(%arg1 : memref<2x512xf32, #tpu.memory_space<any>>)
    return
  }
}

</mosaic_0001>

<llo_original>
// kernel: tpu_custom_call.1
$region0: #{tpu_custom_call.1}
  #allocation0 [shape = 'u32[]', space=smem, size = 0x4, offset = 0x4, fixed_abs, tag = 'smem constant byte address 0x4 - core index']
  #allocation1 [shape = 'u32[144,128]{1,0:T(1,128)}', space=vmem, size = 0x12000, scoped, tag = 'internal scratch']
  #allocation2 [shape = 's32[1]{0}', space=sflag, size = 0x4, scoped, tag = 'scratch operand']
  #allocation3 [shape = 's32[]', space=sflag, size = 0x4, offset = 0, fixed_abs, tag = 'sflag constant byte address 0x0 - dummy sync flag']
  #allocation4 [shape = 'u32[0]{0}', space=smem, size = 0, offset = 0, fixed_abs, tag = 'smem constant byte address 0x0 - null']
  %s0 = inlined_call_operand.hbm [shape: f32[2,512], index: 0, kind: input, shape index: {}]
  %s1 = inlined_call_operand.hbm [shape: f32[2,512], index: 1, kind: output, shape index: {}]
  %s2 = sld [smem:[#allocation0]]
  $region2: #{tpu_custom_call.1} parent=0
    _
  %s4 = ssub.s32 1, %s2
  %s5 = scalar_select 0, %s4, %s2
  %s7 = sshll.u32 1, 14
  %s8 = sxor.u32 4294967295, %s7
  %s11 = sshll.u32 3, 24
  %s12 = sxor.u32 4294967295, %s11
  %s13 = sand.u32 0, %s12
  %s15 = sor.u32 %s13, 0
  %18 = dma.general %s0, 128, %s1, [#allocation2], [#allocation3], [#allocation4], %s15, 0
  %s19 = smul.u32 2, 1
  %s20 = smul.u32 %s19, 4
  %s21 = sshll.u32 %s20, 4
  %22 = dma.done [#allocation2], %s21
  %23 = vsyncmov [#allocation2]
  %s24 = vpop.sfrf %23
  %p25 = scmp.eq.s32.totalorder %s24, 0
  %p26 = pneg %p25
  %28 = shalt.err (%p26)

</llo_original>
